<compile_context>
chip_gen: v5e
topology: v5e:2x2
jax: 0.10.0
libtpu: 0.0.40
codegen_flags: <defaults>
</compile_context>

<pallas_src>
import numpy as np
import jax
import jax.numpy as jnp
from jax import lax
from jax.experimental import pallas as pl
from jax.experimental.pallas import tpu as pltpu


def _round_up(x, m):
    return (x + m - 1) // m * m


def _make_dual_conv_kernel(Cin, Cout, W, KH, KW, L, L_pad):
    """Kernel factory: all shape parameters baked in as Python constants."""
    C2 = 2 * Cin                 # real+imag channels stacked per tap (one sublane group)
    K = KH * KW * C2             # fused contraction depth: taps x {real,imag} x Cin

    def kernel(x_ref, w_ref, b_ref, o_ref, slab_ref):
        # x_ref    : (2*Cin, H*W)    bf16  real channels 0..Cin-1, imag Cin..2*Cin-1
        # w_ref    : (2*Cout, K)     bf16  block-diagonal packed (w_i already negated)
        # b_ref    : (2*Cout, 1)     f32   (b_i already negated)
        # o_ref    : (2*Cout, L_pad) f32   real rows 0..Cout-1, imag rows Cout..2*Cout-1
        # slab_ref : (K, L_pad)      bf16  VMEM scratch: stacked shifted activations

        # Keep never-written tail lanes [L, L_pad) finite (they feed only output
        # lanes that the wrapper discards, but NaN garbage is avoided cheaply).
        if L < L_pad:
            slab_ref[:, L:] = jnp.zeros((K, L_pad - L), slab_ref.dtype)

        # Build the im2col slab in VMEM: tap (i, j) is one contiguous,
        # sublane-aligned (2*Cin, L) block copied from a static lane offset
        # s = i*W + j of the flat H*W axis (always in-bounds: s_max + L = H*W).
        for i in range(KH):
            for j in range(KW):
                t = i * KW + j
                s = i * W + j
                slab_ref[t * C2:(t + 1) * C2, :L] = x_ref[:, s:s + L]

        # Single fused MXU push: taps + real/imag branch live in the K axis.
        acc = jnp.dot(w_ref[...], slab_ref[...],
                      preferred_element_type=jnp.float32)      # (2*Cout, L_pad) f32
        o_ref[...] = acc + b_ref[...]                           # one wide, unmasked store

    return kernel


@jax.jit
def dual_channel_conv2d(x_complex, w_r, b_r, w_i, b_i):
    """x_complex: (N, Cin, H, W) complex64; w_*: (Cout, Cin, KH, KW); b_*: (Cout,)."""
    N, Cin, H, W = x_complex.shape
    Cout, _, KH, KW = w_r.shape
    OH, OW = H - KH + 1, W - KW + 1
    HW = H * W
    # Valid outputs live at flat index oh*W + ow in [0, L); the kernel writes a
    # lane-padded frame of L_pad lanes; wrap columns / pad lanes are dropped below.
    L = (OH - 1) * W + OW
    L_pad = _round_up(OH * W, 128)
    C2 = 2 * Cin
    K = KH * KW * C2

    # Single activation stream: NCHW -> (N, 2*Cin, H*W) is reshape + concat (no transpose).
    xr = jnp.real(x_complex).reshape(N, Cin, HW)
    xi = jnp.imag(x_complex).reshape(N, Cin, HW)
    x_packed = jnp.concatenate([xr, xi], axis=1).astype(jnp.bfloat16)   # (N, 2*Cin, HW)

    # Packed block-diagonal weights: column k = t*(2*Cin) + ch matches slab row k.
    # Rows 0..Cout-1 use w_r on the real channels; rows Cout.. use -w_i on the imag channels.
    wr_t = jnp.asarray(w_r, jnp.float32).transpose(2, 3, 0, 1).reshape(KH * KW, Cout, Cin)
    wi_t = (-jnp.asarray(w_i, jnp.float32)).transpose(2, 3, 0, 1).reshape(KH * KW, Cout, Cin)
    z = jnp.zeros((KH * KW, Cout, Cin), jnp.float32)
    blk = jnp.concatenate([jnp.concatenate([wr_t, z], axis=2),          # (taps, Cout, 2Cin)
                           jnp.concatenate([z, wi_t], axis=2)], axis=1)  # (taps, 2Cout, 2Cin)
    w_packed = blk.transpose(1, 0, 2).reshape(2 * Cout, K).astype(jnp.bfloat16)  # (16, 72)

    b_packed = jnp.concatenate([jnp.asarray(b_r, jnp.float32),
                                -jnp.asarray(b_i, jnp.float32)]).reshape(2 * Cout, 1)

    flops = 4 * N * Cout * OH * OW * Cin * KH * KW                      # 2 convs * MAC
    bytes_accessed = (N * 2 * Cin * HW * 2                              # bf16 activations
                      + 2 * Cout * K * 2                                # bf16 packed weights
                      + 2 * Cout * 4                                    # f32 bias
                      + N * 2 * Cout * L_pad * 4)                       # f32 output

    out_flat = pl.pallas_call(
        _make_dual_conv_kernel(Cin, Cout, W, KH, KW, L, L_pad),
        out_shape=jax.ShapeDtypeStruct((N, 2 * Cout, L_pad), jnp.float32),
        grid=(N,),
        in_specs=[
            pl.BlockSpec((pl.Squeezed(), 2 * Cin, HW), lambda n: (n, 0, 0)),
            pl.BlockSpec((2 * Cout, K), lambda n: (0, 0)),
            pl.BlockSpec((2 * Cout, 1), lambda n: (0, 0)),
        ],
        out_specs=pl.BlockSpec((pl.Squeezed(), 2 * Cout, L_pad), lambda n: (n, 0, 0)),
        scratch_shapes=[pltpu.VMEM((K, L_pad), jnp.bfloat16)],
        compiler_params=pltpu.CompilerParams(
            dimension_semantics=("parallel",)),        # N=2 keeps both v7x TCs busy
        cost_estimate=pl.CostEstimate(flops=flops, transcendentals=0,
                                      bytes_accessed=bytes_accessed),
    )(x_packed, w_packed, b_packed)

    # Transpose-free post-processing: slice to OH*W, fold to (OH, W), drop the
    # KW-1 invalid "wrap" columns -> already NCHW. Real rows 0..Cout-1, imag after.
    out4 = out_flat[:, :, :OH * W].reshape(N, 2 * Cout, OH, W)[:, :, :, :OW]
    return lax.complex(out4[:, :Cout], out4[:, Cout:])


def _reference(x_complex, w_r, b_r, w_i, b_i):
    """Pure-JAX (f32) reference of DualChannelConv2D_Block.forward."""
    xr = jnp.real(x_complex).astype(jnp.float32)
    xi = jnp.imag(x_complex).astype(jnp.float32)
    dn = ('NCHW', 'OIHW', 'NCHW')
    cr = lax.conv_general_dilated(xr, w_r, (1, 1), 'VALID',
                                  dimension_numbers=dn) + b_r[None, :, None, None]
    ci = lax.conv_general_dilated(xi, w_i, (1, 1), 'VALID',
                                  dimension_numbers=dn) + b_i[None, :, None, None]
    return lax.complex(cr, -ci)


if __name__ == "__main__":
    # Small shapes consistent with the module defaults: N=2, Cin=4, Cout=8, H=W=16, k=3.
    N, Cin, Cout, H, W, KH, KW = 2, 4, 8, 16, 16, 3, 3

    key = jax.random.PRNGKey(0)
    k_xr, k_xi, k_wr, k_br, k_wi, k_bi = jax.random.split(key, 6)

    x_real = jax.random.normal(k_xr, (N, Cin, H, W), jnp.float32)
    x_imag = jax.random.normal(k_xi, (N, Cin, H, W), jnp.float32)
    x = lax.complex(x_real, x_imag)

    # Conv2d-style init (kaiming-uniform bound 1/sqrt(fan_in)).
    fan_in = Cin * KH * KW
    bound = 1.0 / np.sqrt(fan_in)
    w_r = jax.random.uniform(k_wr, (Cout, Cin, KH, KW), jnp.float32, -bound, bound)
    b_r = jax.random.uniform(k_br, (Cout,), jnp.float32, -bound, bound)
    w_i = jax.random.uniform(k_wi, (Cout, Cin, KH, KW), jnp.float32, -bound, bound)
    b_i = jax.random.uniform(k_bi, (Cout,), jnp.float32, -bound, bound)

    out = jax.block_until_ready(dual_channel_conv2d(x, w_r, b_r, w_i, b_i))
    ref = jax.block_until_ready(_reference(x, w_r, b_r, w_i, b_i))

    # bf16 operand quantization (f32 accumulation) stays well inside these tolerances.
    np.testing.assert_allclose(np.asarray(jnp.real(out)), np.asarray(jnp.real(ref)),
                               rtol=2e-2, atol=2e-2)
    np.testing.assert_allclose(np.asarray(jnp.imag(out)), np.asarray(jnp.imag(ref)),
                               rtol=2e-2, atol=2e-2)

    print("KERNEL_OK")
</pallas_src>

<mosaic_0001>
module attributes {stable_mosaic.version = 11 : i64} {
  func.func @kernel(%arg0: i32, %arg1: memref<1x8x256xbf16, #tpu.memory_space<vmem>>, %arg2: memref<16x72xbf16, #tpu.memory_space<vmem>>, %arg3: memref<16x1xf32, #tpu.memory_space<vmem>>, %arg4: memref<1x16x256xf32, #tpu.memory_space<vmem>>, %arg5: memref<72x256xbf16, #tpu.memory_space<vmem>>) attributes {dimension_semantics = [#tpu.dimension_semantics<parallel>], iteration_bounds = array<i64: 2>, scalar_prefetch = 0 : i64, scratch_operands = 1 : i64, tpu.core_type = #tpu.core_type<tc>, window_params = [{transform_indices = @transform_0, window_bounds = array<i64: 1, 8, 256>}, {pipeline_mode = #tpu.pipeline_mode<synchronous>, transform_indices = @transform_1, window_bounds = array<i64: 16, 72>}, {pipeline_mode = #tpu.pipeline_mode<synchronous>, transform_indices = @transform_2, window_bounds = array<i64: 16, 1>}, {transform_indices = @transform_3, window_bounds = array<i64: 1, 16, 256>}]} {
    %cst = arith.constant 0.000000e+00 : bf16
    %0 = vector.broadcast %cst : bf16 to vector<72x34xbf16>
    %c0 = arith.constant 0 : index
    %c222 = arith.constant 222 : index
    %1 = vector.load %arg5[%c0, %c222] : memref<72x256xbf16, #tpu.memory_space<vmem>>, vector<72x34xbf16>
    tpu.vector_store %arg5[%c0, %c222], %0 {strides = array<i32>} : memref<72x256xbf16, #tpu.memory_space<vmem>>, vector<72x34xbf16>,
    %c0_0 = arith.constant 0 : index
    %c0_1 = arith.constant 0 : index
    %c0_2 = arith.constant 0 : index
    %2 = vector.load %arg1[%c0_0, %c0_1, %c0_2] : memref<1x8x256xbf16, #tpu.memory_space<vmem>>, vector<1x8x222xbf16>
    %3 = vector.shape_cast %2 : vector<1x8x222xbf16> to vector<8x222xbf16>
    %c0_3 = arith.constant 0 : index
    %c0_4 = arith.constant 0 : index
    %4 = vector.load %arg5[%c0_3, %c0_4] : memref<72x256xbf16, #tpu.memory_space<vmem>>, vector<8x222xbf16>
    tpu.vector_store %arg5[%c0_3, %c0_4], %3 {strides = array<i32>} : memref<72x256xbf16, #tpu.memory_space<vmem>>, vector<8x222xbf16>,
    %c0_5 = arith.constant 0 : index
    %c0_6 = arith.constant 0 : index
    %c1 = arith.constant 1 : index
    %5 = vector.load %arg1[%c0_5, %c0_6, %c1] : memref<1x8x256xbf16, #tpu.memory_space<vmem>>, vector<1x8x222xbf16>
    %6 = vector.shape_cast %5 : vector<1x8x222xbf16> to vector<8x222xbf16>
    %c8 = arith.constant 8 : index
    %c0_7 = arith.constant 0 : index
    %7 = vector.load %arg5[%c8, %c0_7] : memref<72x256xbf16, #tpu.memory_space<vmem>>, vector<8x222xbf16>
    tpu.vector_store %arg5[%c8, %c0_7], %6 {strides = array<i32>} : memref<72x256xbf16, #tpu.memory_space<vmem>>, vector<8x222xbf16>,
    %c0_8 = arith.constant 0 : index
    %c0_9 = arith.constant 0 : index
    %c2 = arith.constant 2 : index
    %8 = vector.load %arg1[%c0_8, %c0_9, %c2] : memref<1x8x256xbf16, #tpu.memory_space<vmem>>, vector<1x8x222xbf16>
    %9 = vector.shape_cast %8 : vector<1x8x222xbf16> to vector<8x222xbf16>
    %c16 = arith.constant 16 : index
    %c0_10 = arith.constant 0 : index
    %10 = vector.load %arg5[%c16, %c0_10] : memref<72x256xbf16, #tpu.memory_space<vmem>>, vector<8x222xbf16>
    tpu.vector_store %arg5[%c16, %c0_10], %9 {strides = array<i32>} : memref<72x256xbf16, #tpu.memory_space<vmem>>, vector<8x222xbf16>,
    %c0_11 = arith.constant 0 : index
    %c0_12 = arith.constant 0 : index
    %c16_13 = arith.constant 16 : index
    %11 = vector.load %arg1[%c0_11, %c0_12, %c16_13] : memref<1x8x256xbf16, #tpu.memory_space<vmem>>, vector<1x8x222xbf16>
    %12 = vector.shape_cast %11 : vector<1x8x222xbf16> to vector<8x222xbf16>
    %c24 = arith.constant 24 : index
    %c0_14 = arith.constant 0 : index
    %13 = vector.load %arg5[%c24, %c0_14] : memref<72x256xbf16, #tpu.memory_space<vmem>>, vector<8x222xbf16>
    tpu.vector_store %arg5[%c24, %c0_14], %12 {strides = array<i32>} : memref<72x256xbf16, #tpu.memory_space<vmem>>, vector<8x222xbf16>,
    %c0_15 = arith.constant 0 : index
    %c0_16 = arith.constant 0 : index
    %c17 = arith.constant 17 : index
    %14 = vector.load %arg1[%c0_15, %c0_16, %c17] : memref<1x8x256xbf16, #tpu.memory_space<vmem>>, vector<1x8x222xbf16>
    %15 = vector.shape_cast %14 : vector<1x8x222xbf16> to vector<8x222xbf16>
    %c32 = arith.constant 32 : index
    %c0_17 = arith.constant 0 : index
    %16 = vector.load %arg5[%c32, %c0_17] : memref<72x256xbf16, #tpu.memory_space<vmem>>, vector<8x222xbf16>
    tpu.vector_store %arg5[%c32, %c0_17], %15 {strides = array<i32>} : memref<72x256xbf16, #tpu.memory_space<vmem>>, vector<8x222xbf16>,
    %c0_18 = arith.constant 0 : index
    %c0_19 = arith.constant 0 : index
    %c18 = arith.constant 18 : index
    %17 = vector.load %arg1[%c0_18, %c0_19, %c18] : memref<1x8x256xbf16, #tpu.memory_space<vmem>>, vector<1x8x222xbf16>
    %18 = vector.shape_cast %17 : vector<1x8x222xbf16> to vector<8x222xbf16>
    %c40 = arith.constant 40 : index
    %c0_20 = arith.constant 0 : index
    %19 = vector.load %arg5[%c40, %c0_20] : memref<72x256xbf16, #tpu.memory_space<vmem>>, vector<8x222xbf16>
    tpu.vector_store %arg5[%c40, %c0_20], %18 {strides = array<i32>} : memref<72x256xbf16, #tpu.memory_space<vmem>>, vector<8x222xbf16>,
    %c0_21 = arith.constant 0 : index
    %c0_22 = arith.constant 0 : index
    %c32_23 = arith.constant 32 : index
    %20 = vector.load %arg1[%c0_21, %c0_22, %c32_23] : memref<1x8x256xbf16, #tpu.memory_space<vmem>>, vector<1x8x222xbf16>
    %21 = vector.shape_cast %20 : vector<1x8x222xbf16> to vector<8x222xbf16>
    %c48 = arith.constant 48 : index
    %c0_24 = arith.constant 0 : index
    %22 = vector.load %arg5[%c48, %c0_24] : memref<72x256xbf16, #tpu.memory_space<vmem>>, vector<8x222xbf16>
    tpu.vector_store %arg5[%c48, %c0_24], %21 {strides = array<i32>} : memref<72x256xbf16, #tpu.memory_space<vmem>>, vector<8x222xbf16>,
    %c0_25 = arith.constant 0 : index
    %c0_26 = arith.constant 0 : index
    %c33 = arith.constant 33 : index
    %23 = vector.load %arg1[%c0_25, %c0_26, %c33] : memref<1x8x256xbf16, #tpu.memory_space<vmem>>, vector<1x8x222xbf16>
    %24 = vector.shape_cast %23 : vector<1x8x222xbf16> to vector<8x222xbf16>
    %c56 = arith.constant 56 : index
    %c0_27 = arith.constant 0 : index
    %25 = vector.load %arg5[%c56, %c0_27] : memref<72x256xbf16, #tpu.memory_space<vmem>>, vector<8x222xbf16>
    tpu.vector_store %arg5[%c56, %c0_27], %24 {strides = array<i32>} : memref<72x256xbf16, #tpu.memory_space<vmem>>, vector<8x222xbf16>,
    %c0_28 = arith.constant 0 : index
    %c0_29 = arith.constant 0 : index
    %c34 = arith.constant 34 : index
    %26 = vector.load %arg1[%c0_28, %c0_29, %c34] : memref<1x8x256xbf16, #tpu.memory_space<vmem>>, vector<1x8x222xbf16>
    %27 = vector.shape_cast %26 : vector<1x8x222xbf16> to vector<8x222xbf16>
    %c64 = arith.constant 64 : index
    %c0_30 = arith.constant 0 : index
    %28 = vector.load %arg5[%c64, %c0_30] : memref<72x256xbf16, #tpu.memory_space<vmem>>, vector<8x222xbf16>
    tpu.vector_store %arg5[%c64, %c0_30], %27 {strides = array<i32>} : memref<72x256xbf16, #tpu.memory_space<vmem>>, vector<8x222xbf16>,
    %c0_31 = arith.constant 0 : index
    %c0_32 = arith.constant 0 : index
    %29 = vector.load %arg2[%c0_31, %c0_32] : memref<16x72xbf16, #tpu.memory_space<vmem>>, vector<16x72xbf16>
    %c0_33 = arith.constant 0 : index
    %c0_34 = arith.constant 0 : index
    %30 = vector.load %arg5[%c0_33, %c0_34] : memref<72x256xbf16, #tpu.memory_space<vmem>>, vector<72x256xbf16>
    %cst_35 = arith.constant dense<0.000000e+00> : vector<16x256xf32>
    %31 = tpu.matmul %29, %30, %cst_35 {dimension_numbers = #tpu.dot_dimension_numbers<[1], [0], [0], [1], [0, 0, 1, 1], [], []>} : vector<16x72xbf16>, vector<72x256xbf16>, vector<16x256xf32> -> vector<16x256xf32>
    %c0_36 = arith.constant 0 : index
    %c0_37 = arith.constant 0 : index
    %32 = vector.load %arg3[%c0_36, %c0_37] : memref<16x1xf32, #tpu.memory_space<vmem>>, vector<16x1xf32>
    %33 = vector.broadcast %32 : vector<16x1xf32> to vector<16x256xf32>
    %34 = arith.addf %31, %33 : vector<16x256xf32>
    %c0_38 = arith.constant 0 : index
    %c0_39 = arith.constant 0 : index
    %c0_40 = arith.constant 0 : index
    %35 = vector.load %arg4[%c0_38, %c0_39, %c0_40] : memref<1x16x256xf32, #tpu.memory_space<vmem>>, vector<1x16x256xf32>
    %36 = vector.shape_cast %35 : vector<1x16x256xf32> to vector<16x256xf32>
    %37 = vector.shape_cast %34 : vector<16x256xf32> to vector<1x16x256xf32>
    tpu.vector_store %arg4[%c0_38, %c0_39, %c0_40], %37 {strides = array<i32>} : memref<1x16x256xf32, #tpu.memory_space<vmem>>, vector<1x16x256xf32>,
    return
  }
  func.func @transform_0(%arg0: i32) -> (i32, i32, i32) {
    %c0_i32 = arith.constant 0 : i32
    %c0_i32_0 = arith.constant 0 : i32
    %c0_i32_1 = arith.constant 0 : i32
    return %arg0, %c0_i32, %c0_i32_0 : i32, i32, i32
  }
  func.func @transform_1(%arg0: i32) -> (i32, i32) {
    %c0_i32 = arith.constant 0 : i32
    %c0_i32_0 = arith.constant 0 : i32
    %c0_i32_1 = arith.constant 0 : i32
    return %c0_i32, %c0_i32_0 : i32, i32
  }
  func.func @transform_2(%arg0: i32) -> (i32, i32) {
    %c0_i32 = arith.constant 0 : i32
    %c0_i32_0 = arith.constant 0 : i32
    %c0_i32_1 = arith.constant 0 : i32
    return %c0_i32, %c0_i32_0 : i32, i32
  }
  func.func @transform_3(%arg0: i32) -> (i32, i32, i32) {
    %c0_i32 = arith.constant 0 : i32
    %c0_i32_0 = arith.constant 0 : i32
    %c0_i32_1 = arith.constant 0 : i32
    return %arg0, %c0_i32, %c0_i32_0 : i32, i32, i32
  }
}

</mosaic_0001>

<llo_original>
// kernel: neg.3
$region0: #{neg.3}
  #allocation0 [shape = 's32[1]{0}', space=sflag, size = 0x4, scoped, tag = 'scoped memory for neg.3']
  %s0 = inlined_call_operand.vmem [shape: f32[8], index: 0, kind: input, shape index: {}]
  %s1 = inlined_call_operand.vmem [shape: f32[8], index: 1, kind: output, shape index: {}]
  %v2 = vld [vmem:[%s0] sm:$0x1]
  %3 = xla_tuple %v2
  %4 = xla_tuple %3
  %v5 = vxor.u32 %v2, 2147483648
  %6 = xla_tuple %v5
  %7 = vst [vmem:[%s1] sm:$0x1] %v5

// kernel: custom-call.1
$region0: #{custom-call.1}
  %s0 = inlined_call_operand.hbm [shape: c64[2,4,16,16], index: 0, kind: input, shape index: {}]
  %s1 = inlined_call_operand.vmem [shape: f32[2,4,16,16], index: 1, kind: output, shape index: {}]
  %s2 = scalar_lea.hbm %s0, 128
  $region1: #{custom-call.1} parent=0
    #allocation0 [shape = 's32[1]{0}', space=sflag, size = 0x4, scoped, tag = 'scoped memory for custom-call.1']
    %3 = vsyncpa [#allocation0], 0
    %s5 = sshll.u32 %s2, 4
    %s6 = int_to_ptr.hbm [resolvable:$true] %s5
    %s7 = sshll.u32 %s1, 4
    %s8 = int_to_ptr.vmem [resolvable:$true] %s7
    %10 = dma.hbm_to_vmem [thread:$0]  %s6, 2048, %s8, [#allocation0]
    %12 = dma.done [#allocation0], 2048
    %13 = vsyncpa [#allocation0], 1

// kernel: custom-call
$region0: #{custom-call}
  %s0 = inlined_call_operand.hbm [shape: c64[2,4,16,16], index: 0, kind: input, shape index: {}]
  %s1 = inlined_call_operand.vmem [shape: f32[2,4,16,16], index: 1, kind: output, shape index: {}]
  $region1: #{custom-call} parent=0
    #allocation0 [shape = 's32[1]{0}', space=sflag, size = 0x4, scoped, tag = 'scoped memory for custom-call']
    %2 = vsyncpa [#allocation0], 0
    %s4 = sshll.u32 %s0, 4
    %s5 = int_to_ptr.hbm [resolvable:$true] %s4
    %s6 = sshll.u32 %s1, 4
    %s7 = int_to_ptr.vmem [resolvable:$true] %s6
    %9 = dma.hbm_to_vmem [thread:$0]  %s5, 2048, %s7, [#allocation0]
    %11 = dma.done [#allocation0], 2048
    %12 = vsyncpa [#allocation0], 1

// kernel: custom-call.2
$region0: #{custom-call.2}
  %s0 = inlined_call_operand.vmem [shape: f32[2,8,14,14], index: 0, kind: input, shape index: {}]
  %s1 = inlined_call_operand.vmem [shape: f32[2,8,14,14], index: 1, kind: input, shape index: {}]
  %s2 = inlined_call_operand.vmem [shape: c64[2,8,14,14], index: 2, kind: output, shape index: {}]
  %s3 = scalar_lea.vmem %s2, 256
  %v4 = vld [vmem:[%s0] sm:$0xff]
  %5 = vst [vmem:[%s2] sm:$0xff] %v4
  %s6 = scalar_lea.vmem %s2, 8
  %s7 = scalar_lea.vmem %s0, 8
  %v8 = vld [vmem:[%s7] sm:$0xff]
  %9 = vst [vmem:[%s6] sm:$0xff] %v8
  %s10 = scalar_lea.vmem %s2, 16
  %s11 = scalar_lea.vmem %s0, 16
  %v12 = vld [vmem:[%s11] sm:$0xff]
  %13 = vst [vmem:[%s10] sm:$0xff] %v12
  %s14 = scalar_lea.vmem %s2, 24
  %s15 = scalar_lea.vmem %s0, 24
  %v16 = vld [vmem:[%s15] sm:$0xff]
  %17 = vst [vmem:[%s14] sm:$0xff] %v16
  %s18 = scalar_lea.vmem %s2, 32
  %s19 = scalar_lea.vmem %s0, 32
  %v20 = vld [vmem:[%s19] sm:$0xff]
  %21 = vst [vmem:[%s18] sm:$0xff] %v20
  %s22 = scalar_lea.vmem %s2, 40
  %s23 = scalar_lea.vmem %s0, 40
  %v24 = vld [vmem:[%s23] sm:$0xff]
  %25 = vst [vmem:[%s22] sm:$0xff] %v24
  %s26 = scalar_lea.vmem %s2, 48
  %s27 = scalar_lea.vmem %s0, 48
  %v28 = vld [vmem:[%s27] sm:$0xff]
  %29 = vst [vmem:[%s26] sm:$0xff] %v28
  %s30 = scalar_lea.vmem %s2, 56
  %s31 = scalar_lea.vmem %s0, 56
  %v32 = vld [vmem:[%s31] sm:$0xff]
  %33 = vst [vmem:[%s30] sm:$0xff] %v32
  %s34 = scalar_lea.vmem %s2, 64
  %s35 = scalar_lea.vmem %s0, 64
  %v36 = vld [vmem:[%s35] sm:$0xff]
  %37 = vst [vmem:[%s34] sm:$0xff] %v36
  %s38 = scalar_lea.vmem %s2, 72
  %s39 = scalar_lea.vmem %s0, 72
  %v40 = vld [vmem:[%s39] sm:$0xff]
  %41 = vst [vmem:[%s38] sm:$0xff] %v40
  %s42 = scalar_lea.vmem %s2, 80
  %s43 = scalar_lea.vmem %s0, 80
  %v44 = vld [vmem:[%s43] sm:$0xff]
  %45 = vst [vmem:[%s42] sm:$0xff] %v44
  %s46 = scalar_lea.vmem %s2, 88
  %s47 = scalar_lea.vmem %s0, 88
  %v48 = vld [vmem:[%s47] sm:$0xff]
  %49 = vst [vmem:[%s46] sm:$0xff] %v48
  %s50 = scalar_lea.vmem %s2, 96
  %s51 = scalar_lea.vmem %s0, 96
  %v52 = vld [vmem:[%s51] sm:$0xff]
  %53 = vst [vmem:[%s50] sm:$0xff] %v52
  %s54 = scalar_lea.vmem %s2, 104
  %s55 = scalar_lea.vmem %s0, 104
  %v56 = vld [vmem:[%s55] sm:$0xff]
  %57 = vst [vmem:[%s54] sm:$0xff] %v56
  %s58 = scalar_lea.vmem %s2, 112
  %s59 = scalar_lea.vmem %s0, 112
  %v60 = vld [vmem:[%s59] sm:$0xff]
  %61 = vst [vmem:[%s58] sm:$0xff] %v60
  %s62 = scalar_lea.vmem %s2, 120
  %s63 = scalar_lea.vmem %s0, 120
  %v64 = vld [vmem:[%s63] sm:$0xff]
  %65 = vst [vmem:[%s62] sm:$0xff] %v64
  %s66 = scalar_lea.vmem %s2, 128
  %s67 = scalar_lea.vmem %s0, 128
  %v68 = vld [vmem:[%s67] sm:$0xff]
  %69 = vst [vmem:[%s66] sm:$0xff] %v68
  %s70 = scalar_lea.vmem %s2, 136
  %s71 = scalar_lea.vmem %s0, 136
  %v72 = vld [vmem:[%s71] sm:$0xff]
  %73 = vst [vmem:[%s70] sm:$0xff] %v72
  %s74 = scalar_lea.vmem %s2, 144
  %s75 = scalar_lea.vmem %s0, 144
  %v76 = vld [vmem:[%s75] sm:$0xff]
  %77 = vst [vmem:[%s74] sm:$0xff] %v76
  %s78 = scalar_lea.vmem %s2, 152
  %s79 = scalar_lea.vmem %s0, 152
  %v80 = vld [vmem:[%s79] sm:$0xff]
  %81 = vst [vmem:[%s78] sm:$0xff] %v80
  %s82 = scalar_lea.vmem %s2, 160
  %s83 = scalar_lea.vmem %s0, 160
  %v84 = vld [vmem:[%s83] sm:$0xff]
  %85 = vst [vmem:[%s82] sm:$0xff] %v84
  %s86 = scalar_lea.vmem %s2, 168
  %s87 = scalar_lea.vmem %s0, 168
  %v88 = vld [vmem:[%s87] sm:$0xff]
  %89 = vst [vmem:[%s86] sm:$0xff] %v88
  %s90 = scalar_lea.vmem %s2, 176
  %s91 = scalar_lea.vmem %s0, 176
  %v92 = vld [vmem:[%s91] sm:$0xff]
  %93 = vst [vmem:[%s90] sm:$0xff] %v92
  %s94 = scalar_lea.vmem %s2, 184
  %s95 = scalar_lea.vmem %s0, 184
  %v96 = vld [vmem:[%s95] sm:$0xff]
  %97 = vst [vmem:[%s94] sm:$0xff] %v96
  %s98 = scalar_lea.vmem %s2, 192
  %s99 = scalar_lea.vmem %s0, 192
  %v100 = vld [vmem:[%s99] sm:$0xff]
  %101 = vst [vmem:[%s98] sm:$0xff] %v100
  %s102 = scalar_lea.vmem %s2, 200
  %s103 = scalar_lea.vmem %s0, 200
  %v104 = vld [vmem:[%s103] sm:$0xff]
  %105 = vst [vmem:[%s102] sm:$0xff] %v104
  %s106 = scalar_lea.vmem %s2, 208
  %s107 = scalar_lea.vmem %s0, 208
  %v108 = vld [vmem:[%s107] sm:$0xff]
  %109 = vst [vmem:[%s106] sm:$0xff] %v108
  %s110 = scalar_lea.vmem %s2, 216
  %s111 = scalar_lea.vmem %s0, 216
  %v112 = vld [vmem:[%s111] sm:$0xff]
  %113 = vst [vmem:[%s110] sm:$0xff] %v112
  %s114 = scalar_lea.vmem %s2, 224
  %s115 = scalar_lea.vmem %s0, 224
  %v116 = vld [vmem:[%s115] sm:$0xff]
  %117 = vst [vmem:[%s114] sm:$0xff] %v116
  %s118 = scalar_lea.vmem %s2, 232
  %s119 = scalar_lea.vmem %s0, 232
  %v120 = vld [vmem:[%s119] sm:$0xff]
  %121 = vst [vmem:[%s118] sm:$0xff] %v120
  %s122 = scalar_lea.vmem %s2, 240
  %s123 = scalar_lea.vmem %s0, 240
  %v124 = vld [vmem:[%s123] sm:$0xff]
  %125 = vst [vmem:[%s122] sm:$0xff] %v124
  %s126 = scalar_lea.vmem %s2, 248
  %s127 = scalar_lea.vmem %s0, 248
  %v128 = vld [vmem:[%s127] sm:$0xff]
  %129 = vst [vmem:[%s126] sm:$0xff] %v128
  %v130 = vld [vmem:[%s1] sm:$0xff]
  %131 = vst [vmem:[%s3] sm:$0xff] %v130
  %s132 = scalar_lea.vmem %s3, 8
  %s133 = scalar_lea.vmem %s1, 8
  %v134 = vld [vmem:[%s133] sm:$0xff]
  %135 = vst [vmem:[%s132] sm:$0xff] %v134
  %s136 = scalar_lea.vmem %s3, 16
  %s137 = scalar_lea.vmem %s1, 16
  %v138 = vld [vmem:[%s137] sm:$0xff]
  %139 = vst [vmem:[%s136] sm:$0xff] %v138
  %s140 = scalar_lea.vmem %s3, 24
  %s141 = scalar_lea.vmem %s1, 24
  %v142 = vld [vmem:[%s141] sm:$0xff]
  %143 = vst [vmem:[%s140] sm:$0xff] %v142
  %s144 = scalar_lea.vmem %s3, 32
  %s145 = scalar_lea.vmem %s1, 32
  %v146 = vld [vmem:[%s145] sm:$0xff]
  %147 = vst [vmem:[%s144] sm:$0xff] %v146
  %s148 = scalar_lea.vmem %s3, 40
  %s149 = scalar_lea.vmem %s1, 40
  %v150 = vld [vmem:[%s149] sm:$0xff]
  %151 = vst [vmem:[%s148] sm:$0xff] %v150
  %s152 = scalar_lea.vmem %s3, 48
  %s153 = scalar_lea.vmem %s1, 48
  %v154 = vld [vmem:[%s153] sm:$0xff]
  %155 = vst [vmem:[%s152] sm:$0xff] %v154
  %s156 = scalar_lea.vmem %s3, 56
  %s157 = scalar_lea.vmem %s1, 56
  %v158 = vld [vmem:[%s157] sm:$0xff]
  %159 = vst [vmem:[%s156] sm:$0xff] %v158
  %s160 = scalar_lea.vmem %s3, 64
  %s161 = scalar_lea.vmem %s1, 64
  %v162 = vld [vmem:[%s161] sm:$0xff]
  %163 = vst [vmem:[%s160] sm:$0xff] %v162
  %s164 = scalar_lea.vmem %s3, 72
  %s165 = scalar_lea.vmem %s1, 72
  %v166 = vld [vmem:[%s165] sm:$0xff]
  %167 = vst [vmem:[%s164] sm:$0xff] %v166
  %s168 = scalar_lea.vmem %s3, 80
  %s169 = scalar_lea.vmem %s1, 80
  %v170 = vld [vmem:[%s169] sm:$0xff]
  %171 = vst [vmem:[%s168] sm:$0xff] %v170
  %s172 = scalar_lea.vmem %s3, 88
  %s173 = scalar_lea.vmem %s1, 88
  %v174 = vld [vmem:[%s173] sm:$0xff]
  %175 = vst [vmem:[%s172] sm:$0xff] %v174
  %s176 = scalar_lea.vmem %s3, 96
  %s177 = scalar_lea.vmem %s1, 96
  %v178 = vld [vmem:[%s177] sm:$0xff]
  %179 = vst [vmem:[%s176] sm:$0xff] %v178
  %s180 = scalar_lea.vmem %s3, 104
  %s181 = scalar_lea.vmem %s1, 104
  %v182 = vld [vmem:[%s181] sm:$0xff]
  %183 = vst [vmem:[%s180] sm:$0xff] %v182
  %s184 = scalar_lea.vmem %s3, 112
  %s185 = scalar_lea.vmem %s1, 112
  %v186 = vld [vmem:[%s185] sm:$0xff]
  %187 = vst [vmem:[%s184] sm:$0xff] %v186
  %s188 = scalar_lea.vmem %s3, 120
  %s189 = scalar_lea.vmem %s1, 120
  %v190 = vld [vmem:[%s189] sm:$0xff]
  %191 = vst [vmem:[%s188] sm:$0xff] %v190
  %s192 = scalar_lea.vmem %s3, 128
  %s193 = scalar_lea.vmem %s1, 128
  %v194 = vld [vmem:[%s193] sm:$0xff]
  %195 = vst [vmem:[%s192] sm:$0xff] %v194
  %s196 = scalar_lea.vmem %s3, 136
  %s197 = scalar_lea.vmem %s1, 136
  %v198 = vld [vmem:[%s197] sm:$0xff]
  %199 = vst [vmem:[%s196] sm:$0xff] %v198
  %s200 = scalar_lea.vmem %s3, 144
  %s201 = scalar_lea.vmem %s1, 144
  %v202 = vld [vmem:[%s201] sm:$0xff]
  %203 = vst [vmem:[%s200] sm:$0xff] %v202
  %s204 = scalar_lea.vmem %s3, 152
  %s205 = scalar_lea.vmem %s1, 152
  %v206 = vld [vmem:[%s205] sm:$0xff]
  %207 = vst [vmem:[%s204] sm:$0xff] %v206
  %s208 = scalar_lea.vmem %s3, 160
  %s209 = scalar_lea.vmem %s1, 160
  %v210 = vld [vmem:[%s209] sm:$0xff]
  %211 = vst [vmem:[%s208] sm:$0xff] %v210
  %s212 = scalar_lea.vmem %s3, 168
  %s213 = scalar_lea.vmem %s1, 168
  %v214 = vld [vmem:[%s213] sm:$0xff]
  %215 = vst [vmem:[%s212] sm:$0xff] %v214
  %s216 = scalar_lea.vmem %s3, 176
  %s217 = scalar_lea.vmem %s1, 176
  %v218 = vld [vmem:[%s217] sm:$0xff]
  %219 = vst [vmem:[%s216] sm:$0xff] %v218
  %s220 = scalar_lea.vmem %s3, 184
  %s221 = scalar_lea.vmem %s1, 184
  %v222 = vld [vmem:[%s221] sm:$0xff]
  %223 = vst [vmem:[%s220] sm:$0xff] %v222
  %s224 = scalar_lea.vmem %s3, 192
  %s225 = scalar_lea.vmem %s1, 192
  %v226 = vld [vmem:[%s225] sm:$0xff]
  %227 = vst [vmem:[%s224] sm:$0xff] %v226
  %s228 = scalar_lea.vmem %s3, 200
  %s229 = scalar_lea.vmem %s1, 200
  %v230 = vld [vmem:[%s229] sm:$0xff]
  %231 = vst [vmem:[%s228] sm:$0xff] %v230
  %s232 = scalar_lea.vmem %s3, 208
  %s233 = scalar_lea.vmem %s1, 208
  %v234 = vld [vmem:[%s233] sm:$0xff]
  %235 = vst [vmem:[%s232] sm:$0xff] %v234
  %s236 = scalar_lea.vmem %s3, 216
  %s237 = scalar_lea.vmem %s1, 216
  %v238 = vld [vmem:[%s237] sm:$0xff]
  %239 = vst [vmem:[%s236] sm:$0xff] %v238
  %s240 = scalar_lea.vmem %s3, 224
  %s241 = scalar_lea.vmem %s1, 224
  %v242 = vld [vmem:[%s241] sm:$0xff]
  %243 = vst [vmem:[%s240] sm:$0xff] %v242
  %s244 = scalar_lea.vmem %s3, 232
  %s245 = scalar_lea.vmem %s1, 232
  %v246 = vld [vmem:[%s245] sm:$0xff]
  %247 = vst [vmem:[%s244] sm:$0xff] %v246
  %s248 = scalar_lea.vmem %s3, 240
  %s249 = scalar_lea.vmem %s1, 240
  %v250 = vld [vmem:[%s249] sm:$0xff]
  %251 = vst [vmem:[%s248] sm:$0xff] %v250
  %s252 = scalar_lea.vmem %s3, 248
  %s253 = scalar_lea.vmem %s1, 248
  %v254 = vld [vmem:[%s253] sm:$0xff]
  %255 = vst [vmem:[%s252] sm:$0xff] %v254

// kernel: dual_channel_conv2d.1
$region0: #{dual_channel_conv2d.1}
  #allocation0 [shape = 'u32[]', space=smem, size = 0x4, offset = 0x4, fixed_abs, tag = 'smem constant byte address 0x4 - core index']
  #allocation1 [shape = 'u32[72,128]{1,0:T(1,128)}', space=vmem, size = 0x9000, scoped, tag = 'internal scratch']
  #allocation2 [shape = 'bf16[72,256]{1,0:T(8,128)(2,1)}', space=vmem, size = 0x9000, scoped, tag = 'scratch operand']
  %s0 = inlined_call_operand.vmem [shape: bf16[2,8,256], index: 0, kind: input, shape index: {}]
  %s1 = inlined_call_operand.vmem [shape: bf16[16,72], index: 1, kind: input, shape index: {}]
  %s2 = inlined_call_operand.vmem [shape: f32[16,1], index: 2, kind: input, shape index: {}]
  %s3 = inlined_call_operand.vmem [shape: f32[2,16,256], index: 3, kind: output, shape index: {}]
  %s4 = sld [smem:[#allocation0]]
  $region45: #{dual_channel_conv2d.1} parent=0
    _
  %s6 = ssub.s32 1, %s4
  %s7 = scalar_select 0, %s6, %s4
  loop: start=0, step=1, limit=4
  $region2: #{dual_channel_conv2d.1} parent=0 // loop_pre_header
    _
  $region3: #{dual_channel_conv2d.1} parent=0 // loop_header
    %s9 = sphi 0, %s13
    %p10 = scmp.ge.s32.totalorder %s9, 4
    %s19 = sphi 0, %s21
    %s22 = sphi 0, %s19
    %s23 = sphi 0, %s22
    %s39 = sphi 0, %s23
    %s43 = sphi 0, %s43
    %s45 = sphi 0, %s43
    %s46 = sphi 0, %s45
    %s60 = sphi 0, %s46
    %s64 = sphi 0, %s64
    %s66 = sphi 0, %s64
    %s67 = sphi 0, %s66
    %s81 = sphi 0, %s67
    %s87 = sphi 0, %s89
    %s90 = sphi 0, %s87
    %s91 = sphi 0, %s90
    %s107 = sphi 0, %s91
  $region4: #{dual_channel_conv2d.1} parent=0 // loop_header_branch
    %12 = sbr.rel (%p10) target = $region8
  $region5: #{dual_channel_conv2d.1} parent=0 // loop_body
    %s14 = ssub.s32 %s9, 1
    %s15 = ssub.s32 %s9, 2
    %s16 = sadd.s32 %s9, 1
    %s17 = ssub.s32 %s9, %s16
    %p18 = scmp.eq.s32.totalorder %s17, 0
    %s20 = sadd.s32 %s19, 1
    %s21 = scalar_select %p18, %s19, %s20
    %p24 = pneg %p18
    %p25 = scmp.eq.s32.totalorder %s9, 1
    %p26 = por %p24, %p25
    %p27 = scmp.ne.s32.totalorder %s19, %s22
    %p28 = scmp.eq.s32.totalorder %s9, 0
    %p29 = por %p27, %p28
    %p30 = scmp.ne.s32.totalorder %s19, %s22
    %p31 = scmp.eq.s32.totalorder %s14, 1
    %p32 = por %p30, %p31
    %p33 = scmp.ne.s32.totalorder %s22, %s23
    %p34 = scmp.eq.s32.totalorder %s14, 0
    %p35 = por %p33, %p34
    %p36 = scmp.ne.s32.totalorder %s22, %s23
    %p37 = scmp.eq.s32.totalorder %s15, 1
    %p38 = por %p36, %p37
    %p40 = scmp.ne.s32.totalorder %s23, %s39
    %p41 = scmp.eq.s32.totalorder %s15, 0
    %p42 = por %p40, %p41
    %s44 = sadd.s32 %s43, 1
    %p47 = scmp.eq.s32.totalorder %s9, 1
    %p48 = scmp.ne.s32.totalorder %s43, %s45
    %p49 = scmp.eq.s32.totalorder %s9, 0
    %p50 = por %p48, %p49
    %p51 = scmp.ne.s32.totalorder %s43, %s45
    %p52 = scmp.eq.s32.totalorder %s14, 1
    %p53 = por %p51, %p52
    %p54 = scmp.ne.s32.totalorder %s45, %s46
    %p55 = scmp.eq.s32.totalorder %s14, 0
    %p56 = por %p54, %p55
    %p57 = scmp.ne.s32.totalorder %s45, %s46
    %p58 = scmp.eq.s32.totalorder %s15, 1
    %p59 = por %p57, %p58
    %p61 = scmp.ne.s32.totalorder %s46, %s60
    %p62 = scmp.eq.s32.totalorder %s15, 0
    %p63 = por %p61, %p62
    %s65 = sadd.s32 %s64, 1
    %p68 = scmp.eq.s32.totalorder %s9, 1
    %p69 = scmp.ne.s32.totalorder %s64, %s66
    %p70 = scmp.eq.s32.totalorder %s9, 0
    %p71 = por %p69, %p70
    %p72 = scmp.ne.s32.totalorder %s64, %s66
    %p73 = scmp.eq.s32.totalorder %s14, 1
    %p74 = por %p72, %p73
    %p75 = scmp.ne.s32.totalorder %s66, %s67
    %p76 = scmp.eq.s32.totalorder %s14, 0
    %p77 = por %p75, %p76
    %p78 = scmp.ne.s32.totalorder %s66, %s67
    %p79 = scmp.eq.s32.totalorder %s15, 1
    %p80 = por %p78, %p79
    %p82 = scmp.ne.s32.totalorder %s67, %s81
    %p83 = scmp.eq.s32.totalorder %s15, 0
    %p84 = por %p82, %p83
    %s85 = ssub.s32 %s9, %s16
    %p86 = scmp.eq.s32.totalorder %s85, 0
    %s88 = sadd.s32 %s87, 1
    %s89 = scalar_select %p86, %s87, %s88
    %p92 = pneg %p86
    %p93 = scmp.eq.s32.totalorder %s9, 1
    %p94 = por %p92, %p93
    %p95 = scmp.ne.s32.totalorder %s87, %s90
    %p96 = scmp.eq.s32.totalorder %s9, 0
    %p97 = por %p95, %p96
    %p98 = scmp.ne.s32.totalorder %s87, %s90
    %p99 = scmp.eq.s32.totalorder %s14, 1
    %p100 = por %p98, %p99
    %p101 = scmp.ne.s32.totalorder %s90, %s91
    %p102 = scmp.eq.s32.totalorder %s14, 0
    %p103 = por %p101, %p102
    %p104 = scmp.ne.s32.totalorder %s90, %s91
    %p105 = scmp.eq.s32.totalorder %s15, 1
    %p106 = por %p104, %p105
    %p108 = scmp.ne.s32.totalorder %s91, %s107
    %p109 = scmp.eq.s32.totalorder %s15, 0
    %p110 = por %p108, %p109
    %p111 = scmp.le.s32.totalorder 1, %s9
    %p112 = scmp.lt.s32.totalorder %s9, 3
    %p113 = pnand %p111, %p112
    %p114 = pneg %p113
    // Predicated region
    $region9: #{dual_channel_conv2d.1} parent=5 // pred_check
      _
    $region10: #{dual_channel_conv2d.1} parent=5 // pred_check_branch
      %116 = sbr.rel (%p113) target = $region12
    $region11: #{dual_channel_conv2d.1} parent=5 // pred_region
      %s117 = ssub.s32 %s9, 1
      // Predicated region
      $region13: #{dual_channel_conv2d.1} parent=11 // pred_check
        %p118 = pneg %p56
      $region14: #{dual_channel_conv2d.1} parent=11 // pred_check_branch
        %120 = sbr.rel (%p118) target = $region16
      $region15: #{dual_channel_conv2d.1} parent=11 // pred_region
        _
      $region16: #{dual_channel_conv2d.1} parent=11 // pred_fallthru
        _
      // Predicated region
      $region17: #{dual_channel_conv2d.1} parent=11 // pred_check
        %p121 = pneg %p77
      $region18: #{dual_channel_conv2d.1} parent=11 // pred_check_branch
        %123 = sbr.rel (%p121) target = $region20
      $region19: #{dual_channel_conv2d.1} parent=11 // pred_region
        _
      $region20: #{dual_channel_conv2d.1} parent=11 // pred_fallthru
        _
    $region12: #{dual_channel_conv2d.1} parent=5 // pred_fallthru
      _
    %p124 = scmp.lt.s32.totalorder %s9, 2
    // Predicated region
    $region21: #{dual_channel_conv2d.1} parent=5 // pred_check
      %p125 = pneg %p124
    $region22: #{dual_channel_conv2d.1} parent=5 // pred_check_branch
      %127 = sbr.rel (%p125) target = $region24
    $region23: #{dual_channel_conv2d.1} parent=5 // pred_region
      // Predicated region
      $region25: #{dual_channel_conv2d.1} parent=23 // pred_check
        %p128 = pneg %p29
      $region26: #{dual_channel_conv2d.1} parent=23 // pred_check_branch
        %130 = sbr.rel (%p128) target = $region28
      $region27: #{dual_channel_conv2d.1} parent=23 // pred_region
        %p131 = scmp.lt.s32.totalorder %s9, 1
        %s132 = scalar_select %p131, %s9, 1
        %s133 = smul.addr %s132, 2
        %s134 = smul.addr %s133, 4
        %s135 = scalar_lea.vmem %s0, %s134
      $region28: #{dual_channel_conv2d.1} parent=23 // pred_fallthru
        _
    $region24: #{dual_channel_conv2d.1} parent=5 // pred_fallthru
      _
    %p136 = scmp.le.s32.totalorder 1, %s9
    %p137 = scmp.lt.s32.totalorder %s9, 3
    %p138 = pnand %p136, %p137
    %p139 = pneg %p138
    // Predicated region
    $region29: #{dual_channel_conv2d.1} parent=5 // pred_check
      _
    $region30: #{dual_channel_conv2d.1} parent=5 // pred_check_branch
      %141 = sbr.rel (%p138) target = $region32
    $region31: #{dual_channel_conv2d.1} parent=5 // pred_region
      %s142 = ssub.s32 %s9, 1
      %p143 = scmp.lt.s32.totalorder %s14, 1
      %s144 = scalar_select %p143, %s14, 1
      %s145 = smul.addr %s144, 2
      %s146 = smul.addr %s145, 4
      %s147 = scalar_lea.vmem %s0, %s146
      %p148 = pneg %p35
      %p149 = pneg %p32
      %p150 = pneg %p56
      %p151 = pneg %p53
      %p152 = pneg %p77
      %p153 = pneg %p74
      %p154 = pneg %p103
      %p155 = pneg %p100
      %p156 = scmp.lt.s32.totalorder %s14, 1
      %s157 = scalar_select %p156, %s14, 1
      %s158 = smul.addr %s157, 4
      %s159 = smul.addr %s158, 8
      %s160 = scalar_lea.vmem %s3, %s159
      %p161 = scmp.lt.s32.totalorder %s14, 1
      %s162 = scalar_select %p161, %s14, 1
      %s163 = smul.addr %s162, 2
      %s164 = smul.addr %s163, 4
      %s165 = scalar_lea.vmem %s0, %s164
      %p166 = scmp.lt.s32.totalorder %s14, 1
      %s167 = scalar_select %p166, %s14, 1
      %s168 = smul.addr %s167, 4
      %s169 = smul.addr %s168, 8
      %s170 = scalar_lea.vmem %s3, %s169
      %vm172 = vcmask 1044208
      %173 = vst.msk [vmem:[#allocation2 + $0x4] sm:$0xf] %vm172, 0
      %174 = vst.msk [vmem:[#allocation2 + $0xc] sm:$0xf] %vm172, 0
      %175 = vst.msk [vmem:[#allocation2 + $0x14] sm:$0xf] %vm172, 0
      %176 = vst.msk [vmem:[#allocation2 + $0x1c] sm:$0xf] %vm172, 0
      %177 = vst.msk [vmem:[#allocation2 + $0x24] sm:$0xf] %vm172, 0
      %178 = vst.msk [vmem:[#allocation2 + $0x2c] sm:$0xf] %vm172, 0
      %179 = vst.msk [vmem:[#allocation2 + $0x34] sm:$0xf] %vm172, 0
      %180 = vst.msk [vmem:[#allocation2 + $0x3c] sm:$0xf] %vm172, 0
      %181 = vst.msk [vmem:[#allocation2 + $0x44] sm:$0xf] %vm172, 0
      %v182 = vld [vmem:[%s165] sm:$0xff]
      %vm183 = vcmask 1043456
      %vm184 = vcmask 769028
      %vm185 = vmor %vm184, %vm183
      %186 = vst.msk [vmem:[#allocation2] sm:$0xff] %vm185, %v182
      %v187 = vld [vmem:[%s165] sm:$0xff]
      %189 = vrot.lane.b32.xlu0 %v187, 127
      %v190 = vpop.permute.xlu0 %189
      %v191 = vrot.slane %v190, 4
      %vm192 = vcmask 1039360
      %v193 = vsel %vm192, %v190, %v191
      %195 = vst.msk [vmem:[#allocation2 + $0x8] sm:$0xff] %vm185, %v193
      %v196 = vld [vmem:[%s165] sm:$0xff]
      %198 = vrot.lane.b32.xlu0 %v196, 126
      %v199 = vpop.permute.xlu0 %198
      %v200 = vrot.slane %v199, 4
      %vm201 = vcmask 1031168
      %v202 = vsel %vm201, %v199, %v200
      %204 = vst.msk [vmem:[#allocation2 + $0x10] sm:$0xff] %vm185, %v202
      %v205 = vld [vmem:[%s165] sm:$0xff]
      %207 = vrot.lane.b32.xlu0 %v205, 112
      %v208 = vpop.permute.xlu0 %207
      %v209 = vrot.slane %v208, 4
      %vm210 = vcmask 916480
      %v211 = vsel %vm210, %v208, %v209
      %213 = vst.msk [vmem:[#allocation2 + $0x18] sm:$0xff] %vm185, %v211
      %v214 = vld [vmem:[%s165] sm:$0xff]
      %216 = vrot.lane.b32.xlu0 %v214, 111
      %v217 = vpop.permute.xlu0 %216
      %v218 = vrot.slane %v217, 4
      %vm219 = vcmask 908288
      %v220 = vsel %vm219, %v217, %v218
      %222 = vst.msk [vmem:[#allocation2 + $0x20] sm:$0xff] %vm185, %v220
      %v223 = vld [vmem:[%s165] sm:$0xff]
      %225 = vrot.lane.b32.xlu0 %v223, 110
      %v226 = vpop.permute.xlu0 %225
      %v227 = vrot.slane %v226, 4
      %vm228 = vcmask 900096
      %v229 = vsel %vm228, %v226, %v227
      %231 = vst.msk [vmem:[#allocation2 + $0x28] sm:$0xff] %vm185, %v229
      %v232 = vld [vmem:[%s165] sm:$0xff]
      %234 = vrot.lane.b32.xlu0 %v232, 96
      %v235 = vpop.permute.xlu0 %234
      %v236 = vrot.slane %v235, 4
      %vm237 = vcmask 785408
      %v238 = vsel %vm237, %v235, %v236
      %240 = vst.msk [vmem:[#allocation2 + $0x30] sm:$0xff] %vm185, %v238
      %v241 = vld [vmem:[%s165] sm:$0xff]
      %243 = vrot.lane.b32.xlu0 %v241, 95
      %v244 = vpop.permute.xlu0 %243
      %v245 = vrot.slane %v244, 4
      %vm246 = vcmask 777216
      %v247 = vsel %vm246, %v244, %v245
      %249 = vst.msk [vmem:[#allocation2 + $0x38] sm:$0xff] %vm185, %v247
      %v250 = vld [vmem:[%s165] sm:$0xff]
      %252 = vrot.lane.b32.xlu0 %v250, 94
      %v253 = vpop.permute.xlu0 %252
      %v254 = vrot.slane %v253, 4
      %vm255 = vcmask 769024
      %v256 = vsel %vm255, %v253, %v254
      %258 = vst.msk [vmem:[#allocation2 + $0x40] sm:$0xff] %vm185, %v256
      %v259 = vld [vmem:[%s1] sm:$0xf]
      %v260 = vld [vmem:[%s1 + $0x4] sm:$0xf]
      %v261 = vld [vmem:[#allocation2] sm:$0xff]
      %v262 = vld [vmem:[#allocation2 + $0x8] sm:$0xff]
      %v263 = vld [vmem:[#allocation2 + $0x10] sm:$0xff]
      %v264 = vld [vmem:[#allocation2 + $0x18] sm:$0xff]
      %v265 = vld [vmem:[#allocation2 + $0x20] sm:$0xff]
      %v266 = vld [vmem:[#allocation2 + $0x28] sm:$0xff]
      %v267 = vld [vmem:[#allocation2 + $0x30] sm:$0xff]
      %v268 = vld [vmem:[#allocation2 + $0x38] sm:$0xff]
      %v269 = vld [vmem:[#allocation2 + $0x40] sm:$0xff]
      %v270 = vld [vmem:[%s2] sm:$0xff]
      %v271 = vld [vmem:[%s2 + $0x8] sm:$0xff]
      %273 = vset.pattern.permute.xlu0 0
      %274 = vperm.xlu0 %273, %v270
      %v275 = vpop.permute.xlu0 %274
      %278 = vset.pattern.permute.xlu0 0
      %279 = vperm.xlu0 %278, %v271
      %v280 = vpop.permute.xlu0 %279
      %v284 = vunpack.c.l.b16 %v259
      %v285 = vunpack.c.l.b16 %v260
      %v286 = vpack.c.b16 %v285, %v284
      %v296 = vunpack.c.l.b16 %v261
      %v297 = vunpack.c.h.b16 %v261
      %v298 = vunpack.c.l.b16 %v262
      %v299 = vunpack.c.h.b16 %v262
      %v300 = vunpack.c.l.b16 %v263
      %v301 = vunpack.c.h.b16 %v263
      %v302 = vunpack.c.l.b16 %v264
      %v303 = vunpack.c.h.b16 %v264
      %v304 = vunpack.c.l.b16 %v265
      %v305 = vunpack.c.h.b16 %v265
      %v306 = vunpack.c.l.b16 %v266
      %v307 = vunpack.c.h.b16 %v266
      %v308 = vunpack.c.l.b16 %v267
      %v309 = vunpack.c.h.b16 %v267
      %v310 = vunpack.c.l.b16 %v268
      %v311 = vunpack.c.h.b16 %v268
      %v312 = vunpack.c.l.b16 %v269
      %v313 = vunpack.c.h.b16 %v269
      %v314 = vpack.c.b16 %v298, %v296
      %v315 = vpack.c.b16 %v299, %v297
      %v316 = vpack.c.b16 %v302, %v300
      %v317 = vpack.c.b16 %v303, %v301
      %v318 = vpack.c.b16 %v306, %v304
      %v319 = vpack.c.b16 %v307, %v305
      %v320 = vpack.c.b16 %v310, %v308
      %v321 = vpack.c.b16 %v311, %v309
      %v322 = vpack.c.b16 %v312, %v312
      %v323 = vpack.c.b16 %v313, %v313
      %vm332 = vcmask 588800
      %v334 = vsel %vm332, %v286, 0
      %v337 = vsel %vm183, %v322, 0
      %v340 = vsel %vm183, %v323, 0
      %342 = vmatpush.bf16.msra.mxu0 0
      %343 = vmatpush.bf16.msra.mxu0 0
      %344 = vmatpush.bf16.msra.mxu0 0
      %345 = vmatpush.bf16.msra.mxu0 %v337
      %346 = vmatpush.bf16.msra.mxu0 %v320
      %347 = vmatpush.bf16.msra.mxu0 %v318
      %348 = vmatpush.bf16.msra.mxu0 %v316
      %349 = vmatpush.bf16.msra.mxu0 %v314
      %350 = vmatmul.bf16.gmra.mxu0 %v334
      %v351 = vpop.f32.mrf.mxu0
      %v352 = vadd.f32 %v275, %v351
      %v353 = vpop.f32.mrf.mxu0
      %v354 = vadd.f32 %v280, %v353
      %355 = vdwg.mxu0
      %356 = vmatpush.bf16.msra.mxu0 0
      %357 = vmatpush.bf16.msra.mxu0 0
      %358 = vmatpush.bf16.msra.mxu0 0
      %359 = vmatpush.bf16.msra.mxu0 %v340
      %360 = vmatpush.bf16.msra.mxu0 %v321
      %361 = vmatpush.bf16.msra.mxu0 %v319
      %362 = vmatpush.bf16.msra.mxu0 %v317
      %363 = vmatpush.bf16.msra.mxu0 %v315
      %364 = vmatmul.bf16.gmra.mxu0 %v334
      %v365 = vpop.f32.mrf.mxu0
      %v366 = vadd.f32 %v275, %v365
      %v367 = vpop.f32.mrf.mxu0
      %v368 = vadd.f32 %v280, %v367
      %369 = vdwg.mxu0
      %370 = vst [vmem:[%s170] sm:$0xff] %v352
      %371 = vst [vmem:[%s170 + $0x8] sm:$0xff] %v366
      %372 = vst [vmem:[%s170 + $0x10] sm:$0xff] %v354
      %373 = vst [vmem:[%s170 + $0x18] sm:$0xff] %v368
      %p374 = scmp.lt.s32.totalorder %s14, 1
      %s375 = scalar_select %p374, %s14, 1
      %s376 = smul.addr %s375, 4
      %s377 = smul.addr %s376, 8
      %s378 = scalar_lea.vmem %s3, %s377
      // Predicated region
      $region33: #{dual_channel_conv2d.1} parent=31 // pred_check
        %p379 = pneg %p100
      $region34: #{dual_channel_conv2d.1} parent=31 // pred_check_branch
        %381 = sbr.rel (%p379) target = $region36
      $region35: #{dual_channel_conv2d.1} parent=31 // pred_region
        _
      $region36: #{dual_channel_conv2d.1} parent=31 // pred_fallthru
        _
    $region32: #{dual_channel_conv2d.1} parent=5 // pred_fallthru
      _
    %p382 = scmp.le.s32.totalorder 2, %s9
    // Predicated region
    $region37: #{dual_channel_conv2d.1} parent=5 // pred_check
      %p383 = pneg %p382
    $region38: #{dual_channel_conv2d.1} parent=5 // pred_check_branch
      %385 = sbr.rel (%p383) target = $region40
    $region39: #{dual_channel_conv2d.1} parent=5 // pred_region
      %s386 = ssub.s32 %s9, 2
      // Predicated region
      $region41: #{dual_channel_conv2d.1} parent=39 // pred_check
        %p387 = pneg %p106
      $region42: #{dual_channel_conv2d.1} parent=39 // pred_check_branch
        %389 = sbr.rel (%p387) target = $region44
      $region43: #{dual_channel_conv2d.1} parent=39 // pred_region
        %p390 = scmp.lt.s32.totalorder %s15, 1
        %s391 = scalar_select %p390, %s15, 1
        %s392 = smul.addr %s391, 4
        %s393 = smul.addr %s392, 8
        %s394 = scalar_lea.vmem %s3, %s393
      $region44: #{dual_channel_conv2d.1} parent=39 // pred_fallthru
        _
    $region40: #{dual_channel_conv2d.1} parent=5 // pred_fallthru
      _
  $region6: #{dual_channel_conv2d.1} parent=0 // loop_footer
    %s13 = sadd.s32 1, %s9
  $region7: #{dual_channel_conv2d.1} parent=0 // loop_footer_branch
    %8 = sbr.rel target = $region3
  $region8: #{dual_channel_conv2d.1} parent=0 // loop_exit
    _

</llo_original>
